<compile_context>
chip_gen: v7x
topology: tpu7x:2x2x1
jax: 0.10.0
libtpu: 0.0.40
codegen_flags: <defaults>
</compile_context>

<pallas_src>
import jax
import jax.numpy as jnp
from jax.experimental import pallas as pl
from jax.experimental.pallas import tpu as pltpu


def focus_conv_kernel(x_ref, w_ref, scale_ref, bias_ref, o_ref):
    # 1x1 conv == matmul over the channel dim (MXU, bf16 in / f32 acc).
    acc = jnp.dot(x_ref[...], w_ref[...], preferred_element_type=jnp.float32)
    # Folded BatchNorm (eval running stats) -> scale/bias, broadcast over rows.
    y = acc * scale_ref[...] + bias_ref[...]
    # SiLU: exp + reciprocal both route to the EUP slot (VALU stays free).
    o_ref[...] = (y * pl.reciprocal(1.0 + jnp.exp(-y), approx=True)).astype(o_ref.dtype)


def focus_forward(x, weight, gamma, beta, running_mean, running_var,
                  eps=1e-5, tm=1024):
    """Focus forward pass. x: (b, c1, h, w) NCHW. weight: (c2, 4*c1, 1, 1)."""
    b, c1, h, w = x.shape
    assert h % 2 == 0 and w % 2 == 0
    h2, w2 = h // 2, w // 2
    c4 = 4 * c1
    c2 = weight.shape[0]

    # Fused space-to-depth + layout change in one transpose (single HBM pass).
    # Resulting K index = (wp*2 + hp)*c1 + c, which matches
    # torch.cat((x[...,::2,::2], x[...,1::2,::2], x[...,::2,1::2], x[...,1::2,1::2]), 1).
    xm = jnp.transpose(
        x.reshape(b, c1, h2, 2, w2, 2), (0, 2, 4, 5, 3, 1)
    ).reshape(b * h2 * w2, c4).astype(jnp.bfloat16)

    # Weight (c2, 4c1, 1, 1) -> (K, N); bf16 for the MXU; pad N to 128 lanes so
    # output stores are lane-dense.
    Np = max(128, ((c2 + 127) // 128) * 128)
    wk = weight.reshape(c2, c4).T.astype(jnp.bfloat16)
    wk = jnp.pad(wk, ((0, 0), (0, Np - c2)))

    # Fold BatchNorm (inference running stats) into scale/bias (kept in f32).
    scale = (gamma / jnp.sqrt(running_var + eps)).astype(jnp.float32)
    bias = (beta - running_mean * scale).astype(jnp.float32)
    scale_p = jnp.pad(scale, (0, Np - c2)).reshape(1, Np)
    bias_p = jnp.pad(bias, (0, Np - c2)).reshape(1, Np)

    M = b * h2 * w2
    # bf16 sublane packing -> row pad to a multiple of 16; tile TM rows per step.
    m16 = ((M + 15) // 16) * 16
    TM = tm if m16 >= tm else m16
    Mp = ((M + TM - 1) // TM) * TM
    if Mp != M:
        xm = jnp.pad(xm, ((0, Mp - M), (0, 0)))

    grid = (Mp // TM,)
    cost = pl.CostEstimate(
        flops=2 * Mp * c4 * Np,
        transcendentals=Mp * Np,
        bytes_accessed=(Mp * c4 * 2          # xm (bf16)
                        + c4 * Np * 2        # wk (bf16)
                        + 2 * Np * 4         # scale + bias (f32)
                        + Mp * Np * 4),      # output (f32)
    )

    out = pl.pallas_call(
        focus_conv_kernel,
        out_shape=jax.ShapeDtypeStruct((Mp, Np), jnp.float32),
        grid=grid,
        in_specs=[
            pl.BlockSpec((TM, c4), lambda i: (i, 0)),   # activations: tiled over M
            pl.BlockSpec((c4, Np), lambda i: (0, 0)),   # weight: resident
            pl.BlockSpec((1, Np), lambda i: (0, 0)),    # BN scale: resident
            pl.BlockSpec((1, Np), lambda i: (0, 0)),    # BN bias: resident
        ],
        out_specs=pl.BlockSpec((TM, Np), lambda i: (i, 0)),
        compiler_params=pltpu.CompilerParams(
            dimension_semantics=("parallel",),          # rowwise-independent -> megacore
        ),
        cost_estimate=cost,
    )(xm, wk, scale_p, bias_p)

    out = out[:M, :c2]
    # (M, N) channels-last -> NCHW (b, c2, h//2, w//2)
    return jnp.transpose(out.reshape(b, h2, w2, c2), (0, 3, 1, 2))


if __name__ == "__main__":
    key = jax.random.PRNGKey(0)
    k_x, k_w = jax.random.split(key)

    b, c1, h, w = 2, 4, 16, 16
    c2 = 8  # output channels

    x = jax.random.normal(k_x, (b, c1, h, w), dtype=jnp.float32)

    # Deterministic parameter init (kernel size k=1 -> weight (c2, 4*c1, 1, 1)).
    fan_in = 4 * c1 * 1 * 1
    bound = 1.0 / (fan_in ** 0.5)
    weight = jax.random.uniform(
        k_w, (c2, 4 * c1, 1, 1), minval=-bound, maxval=bound, dtype=jnp.float32
    )
    # BatchNorm2d default init / running stats.
    gamma = jnp.ones((c2,), jnp.float32)
    beta = jnp.zeros((c2,), jnp.float32)
    running_mean = jnp.zeros((c2,), jnp.float32)
    running_var = jnp.ones((c2,), jnp.float32)

    out = focus_forward(x, weight, gamma, beta, running_mean, running_var)
    jax.block_until_ready(out)

    # Sanity check against a pure-JAX f32 reference (kernel matmul runs in bf16,
    # so allow a small tolerance).
    x_cat = jnp.concatenate(
        [x[..., ::2, ::2], x[..., 1::2, ::2], x[..., ::2, 1::2], x[..., 1::2, 1::2]],
        axis=1,
    )
    ref = jnp.einsum("bkhw,nk->bnhw", x_cat, weight.reshape(c2, 4 * c1))
    scale = gamma / jnp.sqrt(running_var + 1e-5)
    bias = beta - running_mean * scale
    ref = ref * scale[None, :, None, None] + bias[None, :, None, None]
    ref = ref * jax.nn.sigmoid(ref)
    assert out.shape == (b, c2, h // 2, w // 2)
    assert jnp.allclose(out, ref, atol=3e-2, rtol=3e-2)

    print("KERNEL_OK")
</pallas_src>

<mosaic_0001>
module attributes {stable_mosaic.version = 11 : i64} {
  func.func @focus_conv_kernel(%arg0: i32, %arg1: memref<128x16xbf16, #tpu.memory_space<vmem>>, %arg2: memref<16x128xbf16, #tpu.memory_space<vmem>>, %arg3: memref<1x128xf32, #tpu.memory_space<vmem>>, %arg4: memref<1x128xf32, #tpu.memory_space<vmem>>, %arg5: memref<128x128xf32, #tpu.memory_space<vmem>>) attributes {dimension_semantics = [#tpu.dimension_semantics<parallel>], iteration_bounds = array<i64: 1>, scalar_prefetch = 0 : i64, scratch_operands = 0 : i64, tpu.core_type = #tpu.core_type<tc>, window_params = [{transform_indices = @transform_0, window_bounds = array<i64: 128, 16>}, {pipeline_mode = #tpu.pipeline_mode<synchronous>, transform_indices = @transform_1, window_bounds = array<i64: 16, 128>}, {pipeline_mode = #tpu.pipeline_mode<synchronous>, transform_indices = @transform_2, window_bounds = array<i64: 1, 128>}, {pipeline_mode = #tpu.pipeline_mode<synchronous>, transform_indices = @transform_3, window_bounds = array<i64: 1, 128>}, {transform_indices = @transform_4, window_bounds = array<i64: 128, 128>}]} {
    %c0 = arith.constant 0 : index
    %c0_0 = arith.constant 0 : index
    %0 = vector.load %arg1[%c0, %c0_0] : memref<128x16xbf16, #tpu.memory_space<vmem>>, vector<128x16xbf16>
    %c0_1 = arith.constant 0 : index
    %c0_2 = arith.constant 0 : index
    %1 = vector.load %arg2[%c0_1, %c0_2] : memref<16x128xbf16, #tpu.memory_space<vmem>>, vector<16x128xbf16>
    %cst = arith.constant dense<0.000000e+00> : vector<128x128xf32>
    %2 = tpu.matmul %0, %1, %cst {dimension_numbers = #tpu.dot_dimension_numbers<[1], [0], [0], [1], [0, 0, 1, 1], [], []>} : vector<128x16xbf16>, vector<16x128xbf16>, vector<128x128xf32> -> vector<128x128xf32>
    %c0_3 = arith.constant 0 : index
    %c0_4 = arith.constant 0 : index
    %3 = vector.load %arg3[%c0_3, %c0_4] : memref<1x128xf32, #tpu.memory_space<vmem>>, vector<1x128xf32>
    %4 = vector.broadcast %3 : vector<1x128xf32> to vector<128x128xf32>
    %5 = arith.mulf %2, %4 : vector<128x128xf32>
    %c0_5 = arith.constant 0 : index
    %c0_6 = arith.constant 0 : index
    %6 = vector.load %arg4[%c0_5, %c0_6] : memref<1x128xf32, #tpu.memory_space<vmem>>, vector<1x128xf32>
    %7 = vector.broadcast %6 : vector<1x128xf32> to vector<128x128xf32>
    %8 = arith.addf %5, %7 : vector<128x128xf32>
    %cst_7 = arith.constant 0.000000e+00 : f32
    %9 = vector.broadcast %cst_7 : f32 to vector<128x128xf32>
    %10 = arith.subf %9, %8 : vector<128x128xf32>
    %11 = math.exp %10 : vector<128x128xf32>
    %cst_8 = arith.constant 1.000000e+00 : f32
    %12 = vector.broadcast %cst_8 : f32 to vector<128x128xf32>
    %13 = arith.addf %12, %11 : vector<128x128xf32>
    %14 = tpu.reciprocal %13 {approx = true} : vector<128x128xf32> -> vector<128x128xf32>
    %15 = arith.mulf %8, %14 : vector<128x128xf32>
    %c0_9 = arith.constant 0 : index
    %c0_10 = arith.constant 0 : index
    %16 = vector.load %arg5[%c0_9, %c0_10] : memref<128x128xf32, #tpu.memory_space<vmem>>, vector<128x128xf32>
    tpu.vector_store %arg5[%c0_9, %c0_10], %15 {strides = array<i32>} : memref<128x128xf32, #tpu.memory_space<vmem>>, vector<128x128xf32>,
    return
  }
  func.func @transform_0(%arg0: i32) -> (i32, i32) {
    %c0_i32 = arith.constant 0 : i32
    %c0_i32_0 = arith.constant 0 : i32
    return %arg0, %c0_i32 : i32, i32
  }
  func.func @transform_1(%arg0: i32) -> (i32, i32) {
    %c0_i32 = arith.constant 0 : i32
    %c0_i32_0 = arith.constant 0 : i32
    %c0_i32_1 = arith.constant 0 : i32
    return %c0_i32, %c0_i32_0 : i32, i32
  }
  func.func @transform_2(%arg0: i32) -> (i32, i32) {
    %c0_i32 = arith.constant 0 : i32
    %c0_i32_0 = arith.constant 0 : i32
    %c0_i32_1 = arith.constant 0 : i32
    return %c0_i32, %c0_i32_0 : i32, i32
  }
  func.func @transform_3(%arg0: i32) -> (i32, i32) {
    %c0_i32 = arith.constant 0 : i32
    %c0_i32_0 = arith.constant 0 : i32
    %c0_i32_1 = arith.constant 0 : i32
    return %c0_i32, %c0_i32_0 : i32, i32
  }
  func.func @transform_4(%arg0: i32) -> (i32, i32) {
    %c0_i32 = arith.constant 0 : i32
    %c0_i32_0 = arith.constant 0 : i32
    return %arg0, %c0_i32 : i32, i32
  }
}

</mosaic_0001>

<llo_original>
// kernel: tpu_custom_call.1
$region0: #{tpu_custom_call.1}
  #allocation0 [shape = 'u32[]', space=smem, size = 0x4, offset = 0x4, fixed_abs, tag = 'smem constant byte address 0x4 - core index']
  #allocation1 [shape = 'u32[144,128]{1,0:T(1,128)}', space=vmem, size = 0x12000, scoped, tag = 'internal scratch']
  %s0 = inlined_call_operand.vmem [shape: bf16[128,16], index: 0, kind: input, shape index: {}]
  %s1 = inlined_call_operand.vmem [shape: bf16[16,128], index: 1, kind: input, shape index: {}]
  %s2 = inlined_call_operand.vmem [shape: f32[1,128], index: 2, kind: input, shape index: {}]
  %s3 = inlined_call_operand.vmem [shape: f32[1,128], index: 3, kind: input, shape index: {}]
  %s4 = inlined_call_operand.hbm [shape: f32[128,128], index: 4, kind: output, shape index: {}]
  %s5 = sld [smem:[#allocation0]]
  $region26: #{tpu_custom_call.1} parent=0
    _
  %s7 = ssub.s32 1, %s5
  %s8 = scalar_select 0, %s7, %s5
  $region1: #{tpu_custom_call.1} parent=0
    #allocation2 [shape = 'u8[65536]{0}', space=vmem, size = 0x10000, scoped, tag = 'output window, operand 0, single buffered']
    #allocation3 [shape = 's32[1]{0}', space=sflag, size = 0x4, scoped, tag = 'scoped memory for tpu_custom_call.1']
    %9 = vsyncpa [#allocation3], 0
    // Predicated region
    $region2: #{tpu_custom_call.1} parent=1 // pred_check
      _
    $region3: #{tpu_custom_call.1} parent=1 // pred_check_branch
      %11 = sbr.rel (0) target = $region5
    $region4: #{tpu_custom_call.1} parent=1 // pred_region
      _
    $region5: #{tpu_custom_call.1} parent=1 // pred_fallthru
      _
    // Predicated region
    $region6: #{tpu_custom_call.1} parent=1 // pred_check
      _
    $region7: #{tpu_custom_call.1} parent=1 // pred_check_branch
      %13 = sbr.rel (0) target = $region9
    $region8: #{tpu_custom_call.1} parent=1 // pred_region
      _
    $region9: #{tpu_custom_call.1} parent=1 // pred_fallthru
      _
    // Predicated region
    $region10: #{tpu_custom_call.1} parent=1 // pred_check
      _
    $region11: #{tpu_custom_call.1} parent=1 // pred_check_branch
      %15 = sbr.rel (0) target = $region13
    $region12: #{tpu_custom_call.1} parent=1 // pred_region
      _
    $region13: #{tpu_custom_call.1} parent=1 // pred_fallthru
      _
    // Predicated region
    $region14: #{tpu_custom_call.1} parent=1 // pred_check
      _
    $region15: #{tpu_custom_call.1} parent=1 // pred_check_branch
      %17 = sbr.rel (0) target = $region17
    $region16: #{tpu_custom_call.1} parent=1 // pred_region
      _
    $region17: #{tpu_custom_call.1} parent=1 // pred_fallthru
      _
    %v19 = vld [vmem:[%s0] sm:$0xf]
    %v20 = vld [vmem:[%s0 + $0x4] sm:$0xf]
    %v21 = vld [vmem:[%s0 + $0x8] sm:$0xf]
    %v22 = vld [vmem:[%s0 + $0xc] sm:$0xf]
    %v23 = vld [vmem:[%s0 + $0x10] sm:$0xf]
    %v24 = vld [vmem:[%s0 + $0x14] sm:$0xf]
    %v25 = vld [vmem:[%s0 + $0x18] sm:$0xf]
    %v26 = vld [vmem:[%s0 + $0x1c] sm:$0xf]
    %v27 = vld [vmem:[%s0 + $0x20] sm:$0xf]
    %v28 = vld [vmem:[%s0 + $0x24] sm:$0xf]
    %v29 = vld [vmem:[%s0 + $0x28] sm:$0xf]
    %v30 = vld [vmem:[%s0 + $0x2c] sm:$0xf]
    %v31 = vld [vmem:[%s0 + $0x30] sm:$0xf]
    %v32 = vld [vmem:[%s0 + $0x34] sm:$0xf]
    %v33 = vld [vmem:[%s0 + $0x38] sm:$0xf]
    %v34 = vld [vmem:[%s0 + $0x3c] sm:$0xf]
    %v35 = vld [vmem:[%s1] sm:$0xf]
    %v36 = vld [vmem:[%s1 + $0x4] sm:$0xf]
    %v53 = vunpack.c.l.b16 %v19
    %v54 = vunpack.c.l.b16 %v20
    %v55 = vunpack.c.l.b16 %v21
    %v56 = vunpack.c.l.b16 %v22
    %v57 = vunpack.c.l.b16 %v23
    %v58 = vunpack.c.l.b16 %v24
    %v59 = vunpack.c.l.b16 %v25
    %v60 = vunpack.c.l.b16 %v26
    %v61 = vunpack.c.l.b16 %v27
    %v62 = vunpack.c.l.b16 %v28
    %v63 = vunpack.c.l.b16 %v29
    %v64 = vunpack.c.l.b16 %v30
    %v65 = vunpack.c.l.b16 %v31
    %v66 = vunpack.c.l.b16 %v32
    %v67 = vunpack.c.l.b16 %v33
    %v68 = vunpack.c.l.b16 %v34
    %v69 = vpack.c.b16 %v54, %v53
    %v70 = vpack.c.b16 %v56, %v55
    %v71 = vpack.c.b16 %v58, %v57
    %v72 = vpack.c.b16 %v60, %v59
    %v73 = vpack.c.b16 %v62, %v61
    %v74 = vpack.c.b16 %v64, %v63
    %v75 = vpack.c.b16 %v66, %v65
    %v76 = vpack.c.b16 %v68, %v67
    %v79 = vunpack.c.l.b16 %v35
    %v80 = vunpack.c.l.b16 %v36
    %v81 = vpack.c.b16 %v80, %v79
    %vm83 = vcmask 130048
    %v85 = vsel %vm83, %v69, 0
    %v88 = vsel %vm83, %v70, 0
    %v91 = vsel %vm83, %v71, 0
    %v94 = vsel %vm83, %v72, 0
    %v97 = vsel %vm83, %v73, 0
    %v100 = vsel %vm83, %v74, 0
    %v103 = vsel %vm83, %v75, 0
    %v106 = vsel %vm83, %v76, 0
    %108 = vmatprep.subr.bf16.mxu0 0
    %109 = vmatpush1.bf16.msra.mxu0 %v81
    %110 = vmatprep.subr.bf16.mxu0 0
    %111 = vmatpush1.bf16.msra.mxu0 0
    %112 = vmatprep.subr.bf16.mxu0 0
    %113 = vmatpush1.bf16.msra.mxu0 0
    %114 = vmatprep.subr.bf16.mxu0 0
    %115 = vmatpush1.bf16.msra.mxu0 0
    %116 = vmatprep.subr.bf16.mxu0 0
    %117 = vmatpush1.bf16.msra.mxu0 0
    %118 = vmatprep.subr.bf16.mxu0 0
    %119 = vmatpush1.bf16.msra.mxu0 0
    %120 = vmatprep.subr.bf16.mxu0 0
    %121 = vmatpush1.bf16.msra.mxu0 0
    %122 = vmatprep.subr.bf16.mxu0 0
    %123 = vmatpush1.bf16.msra.mxu0 0
    %124 = vmatprep.subr.bf16.mxu0 0
    %125 = vmatpush1.bf16.msra.mxu0 0
    %126 = vmatprep.subr.bf16.mxu0 0
    %127 = vmatpush1.bf16.msra.mxu0 0
    %128 = vmatprep.subr.bf16.mxu0 0
    %129 = vmatpush1.bf16.msra.mxu0 0
    %130 = vmatprep.subr.bf16.mxu0 0
    %131 = vmatpush1.bf16.msra.mxu0 0
    %132 = vmatprep.subr.bf16.mxu0 0
    %133 = vmatpush1.bf16.msra.mxu0 0
    %134 = vmatprep.subr.bf16.mxu0 0
    %135 = vmatpush1.bf16.msra.mxu0 0
    %136 = vmatprep.subr.bf16.mxu0 0
    %137 = vmatpush1.bf16.msra.mxu0 0
    %138 = vmatprep.subr.bf16.mxu0 0
    %139 = vmatpush1.bf16.msra.mxu0 0
    %140 = vmatprep.mubr.bf16.mxu0 0
    %141 = vmatmul.mubr.bf16.gmra.mrb[0].mxu0 %v85
    %v142 = vpop.f32.mrb[0].mxu0
    %v143 = vadd.f32 0.0, %v142
    %v144 = vpop.f32.mrb[0].mxu0
    %v145 = vpop.f32.mrb[0].mxu0
    %v146 = vadd.f32 0.0, %v145
    %v147 = vpop.f32.mrb[0].mxu0
    %148 = vmatprep.mubr.bf16.mxu0 0
    %149 = vmatmul.mubr.bf16.gmra.mrb[0].mxu0 %v88
    %v150 = vpop.f32.mrb[0].mxu0
    %v151 = vadd.f32 0.0, %v150
    %v152 = vpop.f32.mrb[0].mxu0
    %v153 = vpop.f32.mrb[0].mxu0
    %v154 = vadd.f32 0.0, %v153
    %v155 = vpop.f32.mrb[0].mxu0
    %156 = vmatprep.mubr.bf16.mxu0 0
    %157 = vmatmul.mubr.bf16.gmra.mrb[0].mxu0 %v91
    %v158 = vpop.f32.mrb[0].mxu0
    %v159 = vadd.f32 0.0, %v158
    %v160 = vpop.f32.mrb[0].mxu0
    %v161 = vpop.f32.mrb[0].mxu0
    %v162 = vadd.f32 0.0, %v161
    %v163 = vpop.f32.mrb[0].mxu0
    %164 = vmatprep.mubr.bf16.mxu0 0
    %165 = vmatmul.mubr.bf16.gmra.mrb[0].mxu0 %v94
    %v166 = vpop.f32.mrb[0].mxu0
    %v167 = vadd.f32 0.0, %v166
    %v168 = vpop.f32.mrb[0].mxu0
    %v169 = vpop.f32.mrb[0].mxu0
    %v170 = vadd.f32 0.0, %v169
    %v171 = vpop.f32.mrb[0].mxu0
    %172 = vmatprep.mubr.bf16.mxu0 0
    %173 = vmatmul.mubr.bf16.gmra.mrb[0].mxu0 %v97
    %v174 = vpop.f32.mrb[0].mxu0
    %v175 = vadd.f32 0.0, %v174
    %v176 = vpop.f32.mrb[0].mxu0
    %v177 = vpop.f32.mrb[0].mxu0
    %v178 = vadd.f32 0.0, %v177
    %v179 = vpop.f32.mrb[0].mxu0
    %180 = vmatprep.mubr.bf16.mxu0 0
    %181 = vmatmul.mubr.bf16.gmra.mrb[0].mxu0 %v100
    %v182 = vpop.f32.mrb[0].mxu0
    %v183 = vadd.f32 0.0, %v182
    %v184 = vpop.f32.mrb[0].mxu0
    %v185 = vpop.f32.mrb[0].mxu0
    %v186 = vadd.f32 0.0, %v185
    %v187 = vpop.f32.mrb[0].mxu0
    %188 = vmatprep.mubr.bf16.mxu0 0
    %189 = vmatmul.mubr.bf16.gmra.mrb[0].mxu0 %v103
    %v190 = vpop.f32.mrb[0].mxu0
    %v191 = vadd.f32 0.0, %v190
    %v192 = vpop.f32.mrb[0].mxu0
    %v193 = vpop.f32.mrb[0].mxu0
    %v194 = vadd.f32 0.0, %v193
    %v195 = vpop.f32.mrb[0].mxu0
    %196 = vmatprep.mubr.bf16.mxu0 0
    %197 = vmatmul.mubr.bf16.gmra.mrb[0].mxu0 %v106
    %v198 = vpop.f32.mrb[0].mxu0
    %v199 = vadd.f32 0.0, %v198
    %v200 = vpop.f32.mrb[0].mxu0
    %v201 = vpop.f32.mrb[0].mxu0
    %v202 = vadd.f32 0.0, %v201
    %v203 = vpop.f32.mrb[0].mxu0
    %204 = vdwg.mxu0
    %v205 = vld [vmem:[%s2] sm:$0x1]
    %v207 = vlaneseq
    %v208 = vshrl.u32 %v207, 7
    %v209 = vsub.s32 0, %v208
    %v210 = vrot.slane %v205, %v209
    %v212 = vmul.f32 %v143, %v210
    %v213 = vmul.f32 %v146, %v210
    %v214 = vmul.f32 %v151, %v210
    %v215 = vmul.f32 %v154, %v210
    %v216 = vmul.f32 %v159, %v210
    %v217 = vmul.f32 %v162, %v210
    %v218 = vmul.f32 %v167, %v210
    %v219 = vmul.f32 %v170, %v210
    %v220 = vmul.f32 %v175, %v210
    %v221 = vmul.f32 %v178, %v210
    %v222 = vmul.f32 %v183, %v210
    %v223 = vmul.f32 %v186, %v210
    %v224 = vmul.f32 %v191, %v210
    %v225 = vmul.f32 %v194, %v210
    %v226 = vmul.f32 %v199, %v210
    %v227 = vmul.f32 %v202, %v210
    %v228 = vld [vmem:[%s3] sm:$0x1]
    %v230 = vlaneseq
    %v231 = vshrl.u32 %v230, 7
    %v232 = vsub.s32 0, %v231
    %v233 = vrot.slane %v228, %v232
    %v235 = vadd.f32 %v212, %v233
    %v236 = vadd.f32 %v213, %v233
    %v237 = vadd.f32 %v214, %v233
    %v238 = vadd.f32 %v215, %v233
    %v239 = vadd.f32 %v216, %v233
    %v240 = vadd.f32 %v217, %v233
    %v241 = vadd.f32 %v218, %v233
    %v242 = vadd.f32 %v219, %v233
    %v243 = vadd.f32 %v220, %v233
    %v244 = vadd.f32 %v221, %v233
    %v245 = vadd.f32 %v222, %v233
    %v246 = vadd.f32 %v223, %v233
    %v247 = vadd.f32 %v224, %v233
    %v248 = vadd.f32 %v225, %v233
    %v249 = vadd.f32 %v226, %v233
    %v250 = vadd.f32 %v227, %v233
    %v251 = vsub.f32 0.0, %v235
    %v252 = vsub.f32 0.0, %v236
    %v253 = vsub.f32 0.0, %v237
    %v254 = vsub.f32 0.0, %v238
    %v255 = vsub.f32 0.0, %v239
    %v256 = vsub.f32 0.0, %v240
    %v257 = vsub.f32 0.0, %v241
    %v258 = vsub.f32 0.0, %v242
    %v259 = vsub.f32 0.0, %v243
    %v260 = vsub.f32 0.0, %v244
    %v261 = vsub.f32 0.0, %v245
    %v262 = vsub.f32 0.0, %v246
    %v263 = vsub.f32 0.0, %v247
    %v264 = vsub.f32 0.0, %v248
    %v265 = vsub.f32 0.0, %v249
    %v266 = vsub.f32 0.0, %v250
    %v267 = vmul.f32 %v251, 1.442695
    %v268 = vpow.pop %v267
    %v269 = vmul.f32 %v252, 1.442695
    %v270 = vpow.pop %v269
    %v271 = vmul.f32 %v253, 1.442695
    %v272 = vpow.pop %v271
    %v273 = vmul.f32 %v254, 1.442695
    %v274 = vpow.pop %v273
    %v275 = vmul.f32 %v255, 1.442695
    %v276 = vpow.pop %v275
    %v277 = vmul.f32 %v256, 1.442695
    %v278 = vpow.pop %v277
    %v279 = vmul.f32 %v257, 1.442695
    %v280 = vpow.pop %v279
    %v281 = vmul.f32 %v258, 1.442695
    %v282 = vpow.pop %v281
    %v283 = vmul.f32 %v259, 1.442695
    %v284 = vpow.pop %v283
    %v285 = vmul.f32 %v260, 1.442695
    %v286 = vpow.pop %v285
    %v287 = vmul.f32 %v261, 1.442695
    %v288 = vpow.pop %v287
    %v289 = vmul.f32 %v262, 1.442695
    %v290 = vpow.pop %v289
    %v291 = vmul.f32 %v263, 1.442695
    %v292 = vpow.pop %v291
    %v293 = vmul.f32 %v264, 1.442695
    %v294 = vpow.pop %v293
    %v295 = vmul.f32 %v265, 1.442695
    %v296 = vpow.pop %v295
    %v297 = vmul.f32 %v266, 1.442695
    %v298 = vpow.pop %v297
    %v299 = vadd.f32 %v268, 1.0
    %v300 = vadd.f32 %v270, 1.0
    %v301 = vadd.f32 %v272, 1.0
    %v302 = vadd.f32 %v274, 1.0
    %v303 = vadd.f32 %v276, 1.0
    %v304 = vadd.f32 %v278, 1.0
    %v305 = vadd.f32 %v280, 1.0
    %v306 = vadd.f32 %v282, 1.0
    %v307 = vadd.f32 %v284, 1.0
    %v308 = vadd.f32 %v286, 1.0
    %v309 = vadd.f32 %v288, 1.0
    %v310 = vadd.f32 %v290, 1.0
    %v311 = vadd.f32 %v292, 1.0
    %v312 = vadd.f32 %v294, 1.0
    %v313 = vadd.f32 %v296, 1.0
    %v314 = vadd.f32 %v298, 1.0
    %v315 = vrcp.pop %v299
    %v316 = vrcp.pop %v300
    %v317 = vrcp.pop %v301
    %v318 = vrcp.pop %v302
    %v319 = vrcp.pop %v303
    %v320 = vrcp.pop %v304
    %v321 = vrcp.pop %v305
    %v322 = vrcp.pop %v306
    %v323 = vrcp.pop %v307
    %v324 = vrcp.pop %v308
    %v325 = vrcp.pop %v309
    %v326 = vrcp.pop %v310
    %v327 = vrcp.pop %v311
    %v328 = vrcp.pop %v312
    %v329 = vrcp.pop %v313
    %v330 = vrcp.pop %v314
    %v331 = vmul.f32 %v235, %v315
    %v332 = vmul.f32 %v236, %v316
    %v333 = vmul.f32 %v237, %v317
    %v334 = vmul.f32 %v238, %v318
    %v335 = vmul.f32 %v239, %v319
    %v336 = vmul.f32 %v240, %v320
    %v337 = vmul.f32 %v241, %v321
    %v338 = vmul.f32 %v242, %v322
    %v339 = vmul.f32 %v243, %v323
    %v340 = vmul.f32 %v244, %v324
    %v341 = vmul.f32 %v245, %v325
    %v342 = vmul.f32 %v246, %v326
    %v343 = vmul.f32 %v247, %v327
    %v344 = vmul.f32 %v248, %v328
    %v345 = vmul.f32 %v249, %v329
    %v346 = vmul.f32 %v250, %v330
    %347 = vst [vmem:[#allocation2] sm:$0xff] %v331
    %348 = vst [vmem:[#allocation2 + $0x8] sm:$0xff] %v332
    %349 = vst [vmem:[#allocation2 + $0x10] sm:$0xff] %v333
    %350 = vst [vmem:[#allocation2 + $0x18] sm:$0xff] %v334
    %351 = vst [vmem:[#allocation2 + $0x20] sm:$0xff] %v335
    %352 = vst [vmem:[#allocation2 + $0x28] sm:$0xff] %v336
    %353 = vst [vmem:[#allocation2 + $0x30] sm:$0xff] %v337
    %354 = vst [vmem:[#allocation2 + $0x38] sm:$0xff] %v338
    %355 = vst [vmem:[#allocation2 + $0x40] sm:$0xff] %v339
    %356 = vst [vmem:[#allocation2 + $0x48] sm:$0xff] %v340
    %357 = vst [vmem:[#allocation2 + $0x50] sm:$0xff] %v341
    %358 = vst [vmem:[#allocation2 + $0x58] sm:$0xff] %v342
    %359 = vst [vmem:[#allocation2 + $0x60] sm:$0xff] %v343
    %360 = vst [vmem:[#allocation2 + $0x68] sm:$0xff] %v344
    %361 = vst [vmem:[#allocation2 + $0x70] sm:$0xff] %v345
    %362 = vst [vmem:[#allocation2 + $0x78] sm:$0xff] %v346
    // Predicated region
    $region18: #{tpu_custom_call.1} parent=1 // pred_check
      _
    $region19: #{tpu_custom_call.1} parent=1 // pred_check_branch
      %364 = sbr.rel (0) target = $region21
    $region20: #{tpu_custom_call.1} parent=1 // pred_region
      %s366 = ssub.s32 2048, 2048
      %367 = vsyncadd [#allocation3], %s366
      %s368 = sshll.u32 [#allocation2], 4
      %s369 = int_to_ptr.vmem [resolvable:$true] %s368
      %374 = dma.vmem_to_hbm [thread:$0]  %s369, 2048, %s4, [#allocation3], 128, 128, 8
    $region21: #{tpu_custom_call.1} parent=1 // pred_fallthru
      _
    // Predicated region
    $region22: #{tpu_custom_call.1} parent=1 // pred_check
      _
    $region23: #{tpu_custom_call.1} parent=1 // pred_check_branch
      %376 = sbr.rel (0) target = $region25
    $region24: #{tpu_custom_call.1} parent=1 // pred_region
      %377 = dma.done [#allocation3], 2048
    $region25: #{tpu_custom_call.1} parent=1 // pred_fallthru
      _
    %378 = vsyncpa [#allocation3], 1

</llo_original>
